<compile_context>
chip_gen: v6e
topology: v6e:2x2x1
jax: 0.10.0
libtpu: 0.0.40
codegen_flags: <defaults>
</compile_context>

<pallas_src>
import functools
import math

import jax
import jax.numpy as jnp
from jax.experimental import pallas as pl
from jax.experimental.pallas import tpu as pltpu


def _ffn_kernel(x_ref, w1_ref, b1_ref, w2_ref, b2_ref, o_ref, acc_ref, *,
                compute_dtype):
    """One (row-tile, filt-tile) grid step of the fused FFN.

    grid = (row tiles ["parallel"], filt tiles ["arbitrary"/reduction]).
    acc_ref is a float32 (tm, hidden) accumulator living across the filt axis.
    """
    k = pl.program_id(1)

    @pl.when(k == 0)
    def _init():
        acc_ref[...] = jnp.zeros_like(acc_ref)

    # layer1 partial block: x @ W1[:, k-block] + b1[k-block] -> ReLU.
    # Exact under filt tiling because bias-add and ReLU are column-wise.
    # x arrives in its HBM dtype (e.g. f32) and is cast on the VPU here, so the
    # wrapper never spends an extra HBM round trip converting it.
    x = x_ref[...].astype(compute_dtype)
    h = jnp.dot(x, w1_ref[...], preferred_element_type=jnp.float32)
    h = jnp.maximum(h + b1_ref[...], 0.0)
    # TODO(synk): dropout is identity in eval mode; a training-mode kernel
    # would apply pltpu.prng_seed / pltpu.prng_random_bits masking to `h` here.

    # layer2 partial block, accumulated in f32: relu(h) @ W2[k-block, :].
    acc_ref[...] += jnp.dot(h.astype(compute_dtype), w2_ref[...],
                            preferred_element_type=jnp.float32)

    @pl.when(k == pl.num_programs(1) - 1)
    def _finalize():
        o_ref[...] = (acc_ref[...] + b2_ref[...]).astype(o_ref.dtype)


def _vmem_limit_bytes():
    # ~25% headroom below physical per-core VMEM (v7x: 64 -> 48 MiB,
    # v5e/v6e: 128 -> 96 MiB), capped at 100 MiB.
    try:
        cap = pltpu.get_tpu_info().vmem_capacity_bytes
    except Exception:
        cap = 64 << 20  # conservative fallback: smallest (v7x) per-TC VMEM
    return int(min(cap - (cap >> 2), 100 << 20))


def _largest_aligned_divisor(total, max_tile, align):
    """Largest divisor of `total` that is <= max_tile and a multiple of `align`
    (falls back to `total` if none exists)."""
    if total <= max_tile:
        return total
    t = (max_tile // align) * align
    while t >= align:
        if total % t == 0:
            return t
        t -= align
    return total


def feed_forward_network(x, w1, b1, w2, b2, *, block_rows=256, block_filt=2048,
                         compute_dtype=jnp.bfloat16, out_dtype=None):
    """x: (rows, hidden). w1: (hidden, filter). w2: (filter, hidden).

    Returns (rows, hidden) in `out_dtype` (default x.dtype; pass bf16 when the
    consumer allows it to halve writeback bytes).
    """
    rows, hidden = x.shape
    filt = w1.shape[1]
    assert w1.shape == (hidden, filt)
    assert b1.shape == (filt,)
    assert w2.shape == (filt, hidden)
    assert b2.shape == (hidden,)
    out_dtype = x.dtype if out_dtype is None else out_dtype

    # Weights cast to the MXU dtype once here (amortized over every row tile);
    # x stays in its HBM dtype and is cast inside the kernel.  Biases stay f32.
    # TODO(synk): int8 weights would double MXU throughput on v5e/v6e, but v7x
    # MXU is fp8-only -- a generation-aware quantized dtype switch belongs here.
    w1_c = w1.astype(compute_dtype)
    w2_c = w2.astype(compute_dtype)
    b1_2d = b1.reshape(1, filt).astype(jnp.float32)
    b2_2d = b2.reshape(1, hidden).astype(jnp.float32)

    # Row tiling: no host-side padding; the grid uses cdiv and Pallas masks the
    # partial last block (rows are independent, so OOB garbage only feeds that
    # block's own dropped rows).
    tm = min(block_rows, rows)
    if pl.cdiv(rows, tm) < 2 and rows >= 16:
        # v7x shards the "parallel" row axis across its 2 TensorCores; ensure
        # >= 2 row steps whenever the row count allows a multiple-of-8 tile.
        tm = max(8, ((rows // 2) // 8) * 8)
    n_row = pl.cdiv(rows, tm)

    # filt (reduction) tiling: tk is an MXU-aligned divisor of filt so garbage
    # columns never enter the accumulator.  When filt <= block_filt the single
    # block has a constant block index => weights are fetched once and stay
    # VMEM-resident for the whole grid.
    align = 256 if filt % 256 == 0 else (128 if filt % 128 == 0 else filt)
    tk = _largest_aligned_divisor(filt, block_filt, align)
    n_filt = filt // tk
    # TODO(synk): for very large `hidden`, additionally tile the hidden/output
    # axis as a second "parallel" grid dimension to bound W2-block / out VMEM.

    flops = 4 * rows * hidden * filt  # two matmuls, 2 flops per MAC
    bytes_accessed = (x.size * x.dtype.itemsize
                      + rows * hidden * jnp.dtype(out_dtype).itemsize
                      + (w1_c.size + w2_c.size) * jnp.dtype(compute_dtype).itemsize
                      + (filt + hidden) * 4)

    kernel = functools.partial(_ffn_kernel, compute_dtype=compute_dtype)
    return pl.pallas_call(
        kernel,
        out_shape=jax.ShapeDtypeStruct((rows, hidden), out_dtype),
        grid_spec=pltpu.PrefetchScalarGridSpec(
            num_scalar_prefetch=0,
            grid=(n_row, n_filt),
            in_specs=[
                pl.BlockSpec((tm, hidden), lambda i, k: (i, 0)),   # x row tile
                pl.BlockSpec((hidden, tk), lambda i, k: (0, k)),   # W1 filt blk
                pl.BlockSpec((1, tk), lambda i, k: (0, k)),        # b1 filt blk
                pl.BlockSpec((tk, hidden), lambda i, k: (k, 0)),   # W2 filt blk
                pl.BlockSpec((1, hidden), lambda i, k: (0, 0)),    # b2 resident
            ],
            out_specs=pl.BlockSpec((tm, hidden), lambda i, k: (i, 0)),
            scratch_shapes=[pltpu.VMEM((tm, hidden), jnp.float32)],
        ),
        compiler_params=pltpu.CompilerParams(
            dimension_semantics=("parallel", "arbitrary"),
            vmem_limit_bytes=_vmem_limit_bytes(),
        ),
        cost_estimate=pl.CostEstimate(flops=flops, transcendentals=0,
                                      bytes_accessed=bytes_accessed),
    )(x, w1_c, b1_2d, w2_c, b2_2d)


def xavier_uniform(key, fan_in, fan_out, gain=1.0, dtype=jnp.float32):
    # Matches torch.nn.init.xavier_uniform_ (gain('linear') == 1.0).
    bound = gain * math.sqrt(6.0 / (fan_in + fan_out))
    # PyTorch weight shape is (out, in); sample that way, transpose to (in, out).
    w_pt = jax.random.uniform(key, (fan_out, fan_in), dtype=dtype,
                              minval=-bound, maxval=bound)
    return w_pt.T


def linear_bias_init(key, fan_in, fan_out, dtype=jnp.float32):
    # Matches torch nn.Linear default bias init: U(-1/sqrt(fan_in), 1/sqrt(fan_in)).
    bound = 1.0 / math.sqrt(fan_in)
    return jax.random.uniform(key, (fan_out,), dtype=dtype,
                              minval=-bound, maxval=bound)


if __name__ == "__main__":
    # Small but MXU-friendly shapes (hidden/filter multiples of 256 for the
    # 2x256^2 v6e/v7x MXU); rows = batch * seq = 16 -> two parallel row tiles.
    batch, seq, hidden, filt = 2, 8, 256, 512
    dropout_rate = 0.1  # identity in eval mode

    key = jax.random.PRNGKey(0)
    kx, kw1, kb1, kw2, kb2 = jax.random.split(key, 5)

    x = jax.random.normal(kx, (batch, seq, hidden), dtype=jnp.float32)
    w1 = xavier_uniform(kw1, hidden, filt)       # (hidden, filter)
    b1 = linear_bias_init(kb1, hidden, filt)     # (filter,)
    w2 = xavier_uniform(kw2, filt, hidden)       # (filter, hidden)
    b2 = linear_bias_init(kb2, filt, hidden)     # (hidden,)

    x2d = x.reshape(batch * seq, hidden)
    out2d = feed_forward_network(x2d, w1, b1, w2, b2)
    out = out2d.reshape(batch, seq, hidden)
    jax.block_until_ready(out)

    # Reference with the same bf16-operand / f32-accumulation recipe.
    xb = x2d.astype(jnp.bfloat16)
    h_ref = jnp.maximum(
        jnp.dot(xb, w1.astype(jnp.bfloat16),
                preferred_element_type=jnp.float32) + b1, 0.0)
    ref = jnp.dot(h_ref.astype(jnp.bfloat16), w2.astype(jnp.bfloat16),
                  preferred_element_type=jnp.float32) + b2
    assert jnp.allclose(out2d, ref, atol=2e-3, rtol=2e-3), \
        float(jnp.max(jnp.abs(out2d - ref)))

    # Sanity vs. full-f32 math (loose, norm-based: bf16 MXU operands).
    ref_f32 = jnp.maximum(x2d @ w1 + b1, 0.0) @ w2 + b2
    rel = jnp.linalg.norm(out2d - ref_f32) / jnp.linalg.norm(ref_f32)
    assert rel < 1e-2, float(rel)

    print("KERNEL_OK")
</pallas_src>

<mosaic_0001>
module attributes {stable_mosaic.version = 11 : i64} {
  func.func @_ffn_kernel(%arg0: i32, %arg1: i32, %arg2: memref<8x256xf32, #tpu.memory_space<vmem>>, %arg3: memref<256x512xbf16, #tpu.memory_space<vmem>>, %arg4: memref<1x512xf32, #tpu.memory_space<vmem>>, %arg5: memref<512x256xbf16, #tpu.memory_space<vmem>>, %arg6: memref<1x256xf32, #tpu.memory_space<vmem>>, %arg7: memref<8x256xf32, #tpu.memory_space<vmem>>, %arg8: memref<8x256xf32, #tpu.memory_space<vmem>>) attributes {dimension_semantics = [#tpu.dimension_semantics<parallel>, #tpu.dimension_semantics<arbitrary>], iteration_bounds = array<i64: 2, 1>, scalar_prefetch = 0 : i64, scratch_operands = 1 : i64, tpu.core_type = #tpu.core_type<tc>, window_params = [{transform_indices = @transform_0, window_bounds = array<i64: 8, 256>}, {transform_indices = @transform_1, window_bounds = array<i64: 256, 512>}, {transform_indices = @transform_2, window_bounds = array<i64: 1, 512>}, {transform_indices = @transform_3, window_bounds = array<i64: 512, 256>}, {pipeline_mode = #tpu.pipeline_mode<synchronous>, transform_indices = @transform_4, window_bounds = array<i64: 1, 256>}, {transform_indices = @transform_5, window_bounds = array<i64: 8, 256>}]} {
    %c0_i32 = arith.constant 0 : i32
    %0 = arith.cmpi eq, %arg1, %c0_i32 : i32
    %1 = arith.extui %0 : i1 to i32
    %c0_i32_0 = arith.constant 0 : i32
    %2 = arith.cmpi ne, %1, %c0_i32_0 : i32
    scf.if %2 {
      %cst_16 = arith.constant 0.000000e+00 : f32
      %21 = vector.broadcast %cst_16 : f32 to vector<8x256xf32>
      %c0_17 = arith.constant 0 : index
      %c0_18 = arith.constant 0 : index
      %22 = vector.load %arg8[%c0_17, %c0_18] : memref<8x256xf32, #tpu.memory_space<vmem>>, vector<8x256xf32>
      tpu.vector_store %arg8[%c0_17, %c0_18], %21 {strides = array<i32>} : memref<8x256xf32, #tpu.memory_space<vmem>>, vector<8x256xf32>,
    } else {
    }
    %c0 = arith.constant 0 : index
    %c0_1 = arith.constant 0 : index
    %3 = vector.load %arg2[%c0, %c0_1] : memref<8x256xf32, #tpu.memory_space<vmem>>, vector<8x256xf32>
    %4 = arith.truncf %3 : vector<8x256xf32> to vector<8x256xbf16>
    %c0_2 = arith.constant 0 : index
    %c0_3 = arith.constant 0 : index
    %5 = vector.load %arg3[%c0_2, %c0_3] : memref<256x512xbf16, #tpu.memory_space<vmem>>, vector<256x512xbf16>
    %cst = arith.constant dense<0.000000e+00> : vector<8x512xf32>
    %6 = tpu.matmul %4, %5, %cst {dimension_numbers = #tpu.dot_dimension_numbers<[1], [0], [0], [1], [0, 0, 1, 1], [], []>} : vector<8x256xbf16>, vector<256x512xbf16>, vector<8x512xf32> -> vector<8x512xf32>
    %c0_4 = arith.constant 0 : index
    %c0_5 = arith.constant 0 : index
    %7 = vector.load %arg4[%c0_4, %c0_5] : memref<1x512xf32, #tpu.memory_space<vmem>>, vector<1x512xf32>
    %8 = vector.broadcast %7 : vector<1x512xf32> to vector<8x512xf32>
    %9 = arith.addf %6, %8 : vector<8x512xf32>
    %cst_6 = arith.constant 0.000000e+00 : f32
    %10 = vector.broadcast %cst_6 : f32 to vector<8x512xf32>
    %11 = arith.maximumf %9, %10 : vector<8x512xf32>
    %c0_7 = arith.constant 0 : index
    %c0_8 = arith.constant 0 : index
    %12 = vector.load %arg8[%c0_7, %c0_8] : memref<8x256xf32, #tpu.memory_space<vmem>>, vector<8x256xf32>
    %13 = arith.truncf %11 : vector<8x512xf32> to vector<8x512xbf16>
    %c0_9 = arith.constant 0 : index
    %c0_10 = arith.constant 0 : index
    %14 = vector.load %arg5[%c0_9, %c0_10] : memref<512x256xbf16, #tpu.memory_space<vmem>>, vector<512x256xbf16>
    %cst_11 = arith.constant dense<0.000000e+00> : vector<8x256xf32>
    %15 = tpu.matmul %13, %14, %cst_11 {dimension_numbers = #tpu.dot_dimension_numbers<[1], [0], [0], [1], [0, 0, 1, 1], [], []>} : vector<8x512xbf16>, vector<512x256xbf16>, vector<8x256xf32> -> vector<8x256xf32>
    %16 = arith.addf %12, %15 : vector<8x256xf32>
    %c0_12 = arith.constant 0 : index
    %c0_13 = arith.constant 0 : index
    %17 = vector.load %arg8[%c0_12, %c0_13] : memref<8x256xf32, #tpu.memory_space<vmem>>, vector<8x256xf32>
    tpu.vector_store %arg8[%c0_12, %c0_13], %16 {strides = array<i32>} : memref<8x256xf32, #tpu.memory_space<vmem>>, vector<8x256xf32>,
    %c0_i32_14 = arith.constant 0 : i32
    %18 = arith.cmpi eq, %arg1, %c0_i32_14 : i32
    %19 = arith.extui %18 : i1 to i32
    %c0_i32_15 = arith.constant 0 : i32
    %20 = arith.cmpi ne, %19, %c0_i32_15 : i32
    scf.if %20 {
      %c0_16 = arith.constant 0 : index
      %c0_17 = arith.constant 0 : index
      %21 = vector.load %arg8[%c0_16, %c0_17] : memref<8x256xf32, #tpu.memory_space<vmem>>, vector<8x256xf32>
      %c0_18 = arith.constant 0 : index
      %c0_19 = arith.constant 0 : index
      %22 = vector.load %arg6[%c0_18, %c0_19] : memref<1x256xf32, #tpu.memory_space<vmem>>, vector<1x256xf32>
      %23 = vector.broadcast %22 : vector<1x256xf32> to vector<8x256xf32>
      %24 = arith.addf %21, %23 : vector<8x256xf32>
      %c0_20 = arith.constant 0 : index
      %c0_21 = arith.constant 0 : index
      %25 = vector.load %arg7[%c0_20, %c0_21] : memref<8x256xf32, #tpu.memory_space<vmem>>, vector<8x256xf32>
      tpu.vector_store %arg7[%c0_20, %c0_21], %24 {strides = array<i32>} : memref<8x256xf32, #tpu.memory_space<vmem>>, vector<8x256xf32>,
    } else {
    }
    return
  }
  func.func @transform_0(%arg0: i32, %arg1: i32) -> (i32, i32) {
    %c0_i32 = arith.constant 0 : i32
    %c0_i32_0 = arith.constant 0 : i32
    return %arg0, %c0_i32 : i32, i32
  }
  func.func @transform_1(%arg0: i32, %arg1: i32) -> (i32, i32) {
    %c0_i32 = arith.constant 0 : i32
    %c0_i32_0 = arith.constant 0 : i32
    return %c0_i32, %arg1 : i32, i32
  }
  func.func @transform_2(%arg0: i32, %arg1: i32) -> (i32, i32) {
    %c0_i32 = arith.constant 0 : i32
    %c0_i32_0 = arith.constant 0 : i32
    return %c0_i32, %arg1 : i32, i32
  }
  func.func @transform_3(%arg0: i32, %arg1: i32) -> (i32, i32) {
    %c0_i32 = arith.constant 0 : i32
    %c0_i32_0 = arith.constant 0 : i32
    return %arg1, %c0_i32 : i32, i32
  }
  func.func @transform_4(%arg0: i32, %arg1: i32) -> (i32, i32) {
    %c0_i32 = arith.constant 0 : i32
    %c0_i32_0 = arith.constant 0 : i32
    %c0_i32_1 = arith.constant 0 : i32
    return %c0_i32, %c0_i32_0 : i32, i32
  }
  func.func @transform_5(%arg0: i32, %arg1: i32) -> (i32, i32) {
    %c0_i32 = arith.constant 0 : i32
    %c0_i32_0 = arith.constant 0 : i32
    return %arg0, %c0_i32 : i32, i32
  }
}

</mosaic_0001>

<llo_original>
// kernel: tpu_custom_call.1
$region0: #{tpu_custom_call.1}
  #allocation0 [shape = 'u32[]', space=smem, size = 0x4, offset = 0x4, fixed_abs, tag = 'smem constant byte address 0x4 - core index']
  #allocation1 [shape = 'u32[144,128]{1,0:T(1,128)}', space=vmem, size = 0x12000, scoped, tag = 'internal scratch']
  #allocation2 [shape = 'f32[8,256]{1,0:T(8,128)}', space=vmem, size = 0x2000, scoped, tag = 'scratch operand']
  %s0 = inlined_call_operand.hbm [shape: f32[16,256], index: 0, kind: input, shape index: {}]
  %s1 = inlined_call_operand.hbm [shape: bf16[256,512], index: 1, kind: input, shape index: {}]
  %s2 = inlined_call_operand.hbm [shape: f32[1,512], index: 2, kind: input, shape index: {}]
  %s3 = inlined_call_operand.hbm [shape: bf16[512,256], index: 3, kind: input, shape index: {}]
  %s4 = inlined_call_operand.vmem [shape: f32[1,256], index: 4, kind: input, shape index: {}]
  %s5 = inlined_call_operand.hbm [shape: f32[16,256], index: 5, kind: output, shape index: {}]
  %s6 = sld [smem:[#allocation0]]
  $region77: #{tpu_custom_call.1} parent=0
    _
  %s8 = ssub.s32 1, %s6
  %s9 = scalar_select 0, %s8, %s6
  $region1: #{tpu_custom_call.1} parent=0
    #allocation3 [shape = 'u8[16384]{0}', space=vmem, size = 0x4000, scoped, tag = 'input window, operand 0']
    #allocation4 [shape = 's32[2]{0}', space=sflag, size = 0x8, scoped, tag = 'scoped memory for tpu_custom_call.1']
    #allocation5 [shape = 's32[2]{0}', space=sflag, size = 0x8, scoped, tag = 'scoped memory for tpu_custom_call.1']
    #allocation6 [shape = 'u8[262144]{0}', space=vmem, size = 0x40000, scoped, tag = 'input window, operand 1, single buffered']
    #allocation7 [shape = 's32[1]{0}', space=sflag, size = 0x4, scoped, tag = 'scoped memory for tpu_custom_call.1']
    #allocation8 [shape = 'u8[2048]{0}', space=vmem, size = 0x800, scoped, tag = 'input window, operand 2, single buffered']
    #allocation9 [shape = 'u8[262144]{0}', space=vmem, size = 0x40000, scoped, tag = 'input window, operand 3, single buffered']
    #allocation10 [shape = 's32[1]{0}', space=sflag, size = 0x4, scoped, tag = 'scoped memory for tpu_custom_call.1']
    #allocation11 [shape = 'u8[16384]{0}', space=vmem, size = 0x4000, scoped, tag = 'output window, operand 0']
    %10 = vsyncpa [#allocation4], 0
    %s11 = scalar_lea.sflag [#allocation4], 1
    %12 = vsyncpa %s11, 0
    %13 = vsyncpa [#allocation7], 0
    %14 = vsyncpa [#allocation10], 0
    %15 = vsyncpa [#allocation5], 0
    %s16 = scalar_lea.sflag [#allocation5], 1
    %17 = vsyncpa %s16, 0
    loop: start=0, step=1, limit=4
    $region2: #{tpu_custom_call.1} parent=1 // loop_pre_header
      _
    $region3: #{tpu_custom_call.1} parent=1 // loop_header
      %s19 = sphi 0, %s23
      %p20 = scmp.ge.s32.totalorder %s19, 4
      %s26 = sphi 0, %s38
      %s27 = sphi 0, %s34
      %s28 = sphi 0, %s26
      %s29 = sphi 0, %s27
      %s30 = sphi 0, %s28
      %s31 = sphi 0, %s29
      %s41 = sphi 0, %s43
      %s44 = sphi 0, %s41
      %s45 = sphi 0, %s44
      %s61 = sphi 0, %s45
      %s67 = sphi 0, %s69
      %s70 = sphi 0, %s67
      %s71 = sphi 0, %s70
      %s87 = sphi 0, %s71
      %s93 = sphi 0, %s95
      %s96 = sphi 0, %s93
      %s97 = sphi 0, %s96
      %s113 = sphi 0, %s97
      %s119 = sphi 0, %s121
      %s122 = sphi 0, %s119
      %s123 = sphi 0, %s122
      %s139 = sphi 0, %s123
      %s143 = sphi 0, %s143
      %s145 = sphi 0, %s143
      %s146 = sphi 0, %s145
      %s160 = sphi 0, %s146
      %s166 = sphi 0, %s168
      %s169 = sphi 0, %s166
      %s170 = sphi 0, %s169
      %s186 = sphi 0, %s170
    $region4: #{tpu_custom_call.1} parent=1 // loop_header_branch
      %22 = sbr.rel (%p20) target = $region8
    $region5: #{tpu_custom_call.1} parent=1 // loop_body
      %s24 = ssub.s32 %s19, 1
      %s25 = ssub.s32 %s19, 2
      %s32 = sadd.s32 1, %s27
      %p33 = scmp.ge.s32.totalorder %s32, 1
      %s34 = scalar_select %p33, 0, %s32
      %s35 = sadd.s32 1, %s26
      %s36 = scalar_select %p33, %s35, %s26
      %p37 = scmp.ge.s32.totalorder %s36, 2
      %s38 = scalar_select %p37, 0, %s36
      %s39 = ssub.s32 %s26, %s38
      %p40 = scmp.eq.s32.totalorder %s39, 0
      %s42 = sadd.s32 %s41, 1
      %s43 = scalar_select %p40, %s41, %s42
      %p46 = pneg %p40
      %p47 = scmp.eq.s32.totalorder %s19, 1
      %p48 = por %p46, %p47
      %p49 = scmp.ne.s32.totalorder %s41, %s44
      %p50 = scmp.eq.s32.totalorder %s19, 0
      %p51 = por %p49, %p50
      %p52 = scmp.ne.s32.totalorder %s41, %s44
      %p53 = scmp.eq.s32.totalorder %s24, 1
      %p54 = por %p52, %p53
      %p55 = scmp.ne.s32.totalorder %s44, %s45
      %p56 = scmp.eq.s32.totalorder %s24, 0
      %p57 = por %p55, %p56
      %p58 = scmp.ne.s32.totalorder %s44, %s45
      %p59 = scmp.eq.s32.totalorder %s25, 1
      %p60 = por %p58, %p59
      %p62 = scmp.ne.s32.totalorder %s45, %s61
      %p63 = scmp.eq.s32.totalorder %s25, 0
      %p64 = por %p62, %p63
      %s65 = ssub.s32 %s27, %s34
      %p66 = scmp.eq.s32.totalorder %s65, 0
      %s68 = sadd.s32 %s67, 1
      %s69 = scalar_select %p66, %s67, %s68
      %p72 = pneg %p66
      %p73 = scmp.eq.s32.totalorder %s19, 1
      %p74 = por %p72, %p73
      %p75 = scmp.ne.s32.totalorder %s67, %s70
      %p76 = scmp.eq.s32.totalorder %s19, 0
      %p77 = por %p75, %p76
      %p78 = scmp.ne.s32.totalorder %s67, %s70
      %p79 = scmp.eq.s32.totalorder %s24, 1
      %p80 = por %p78, %p79
      %p81 = scmp.ne.s32.totalorder %s70, %s71
      %p82 = scmp.eq.s32.totalorder %s24, 0
      %p83 = por %p81, %p82
      %p84 = scmp.ne.s32.totalorder %s70, %s71
      %p85 = scmp.eq.s32.totalorder %s25, 1
      %p86 = por %p84, %p85
      %p88 = scmp.ne.s32.totalorder %s71, %s87
      %p89 = scmp.eq.s32.totalorder %s25, 0
      %p90 = por %p88, %p89
      %s91 = ssub.s32 %s27, %s34
      %p92 = scmp.eq.s32.totalorder %s91, 0
      %s94 = sadd.s32 %s93, 1
      %s95 = scalar_select %p92, %s93, %s94
      %p98 = pneg %p92
      %p99 = scmp.eq.s32.totalorder %s19, 1
      %p100 = por %p98, %p99
      %p101 = scmp.ne.s32.totalorder %s93, %s96
      %p102 = scmp.eq.s32.totalorder %s19, 0
      %p103 = por %p101, %p102
      %p104 = scmp.ne.s32.totalorder %s93, %s96
      %p105 = scmp.eq.s32.totalorder %s24, 1
      %p106 = por %p104, %p105
      %p107 = scmp.ne.s32.totalorder %s96, %s97
      %p108 = scmp.eq.s32.totalorder %s24, 0
      %p109 = por %p107, %p108
      %p110 = scmp.ne.s32.totalorder %s96, %s97
      %p111 = scmp.eq.s32.totalorder %s25, 1
      %p112 = por %p110, %p111
      %p114 = scmp.ne.s32.totalorder %s97, %s113
      %p115 = scmp.eq.s32.totalorder %s25, 0
      %p116 = por %p114, %p115
      %s117 = ssub.s32 %s27, %s34
      %p118 = scmp.eq.s32.totalorder %s117, 0
      %s120 = sadd.s32 %s119, 1
      %s121 = scalar_select %p118, %s119, %s120
      %p124 = pneg %p118
      %p125 = scmp.eq.s32.totalorder %s19, 1
      %p126 = por %p124, %p125
      %p127 = scmp.ne.s32.totalorder %s119, %s122
      %p128 = scmp.eq.s32.totalorder %s19, 0
      %p129 = por %p127, %p128
      %p130 = scmp.ne.s32.totalorder %s119, %s122
      %p131 = scmp.eq.s32.totalorder %s24, 1
      %p132 = por %p130, %p131
      %p133 = scmp.ne.s32.totalorder %s122, %s123
      %p134 = scmp.eq.s32.totalorder %s24, 0
      %p135 = por %p133, %p134
      %p136 = scmp.ne.s32.totalorder %s122, %s123
      %p137 = scmp.eq.s32.totalorder %s25, 1
      %p138 = por %p136, %p137
      %p140 = scmp.ne.s32.totalorder %s123, %s139
      %p141 = scmp.eq.s32.totalorder %s25, 0
      %p142 = por %p140, %p141
      %s144 = sadd.s32 %s143, 1
      %p147 = scmp.eq.s32.totalorder %s19, 1
      %p148 = scmp.ne.s32.totalorder %s143, %s145
      %p149 = scmp.eq.s32.totalorder %s19, 0
      %p150 = por %p148, %p149
      %p151 = scmp.ne.s32.totalorder %s143, %s145
      %p152 = scmp.eq.s32.totalorder %s24, 1
      %p153 = por %p151, %p152
      %p154 = scmp.ne.s32.totalorder %s145, %s146
      %p155 = scmp.eq.s32.totalorder %s24, 0
      %p156 = por %p154, %p155
      %p157 = scmp.ne.s32.totalorder %s145, %s146
      %p158 = scmp.eq.s32.totalorder %s25, 1
      %p159 = por %p157, %p158
      %p161 = scmp.ne.s32.totalorder %s146, %s160
      %p162 = scmp.eq.s32.totalorder %s25, 0
      %p163 = por %p161, %p162
      %s164 = ssub.s32 %s26, %s38
      %p165 = scmp.eq.s32.totalorder %s164, 0
      %s167 = sadd.s32 %s166, 1
      %s168 = scalar_select %p165, %s166, %s167
      %p171 = pneg %p165
      %p172 = scmp.eq.s32.totalorder %s19, 1
      %p173 = por %p171, %p172
      %p174 = scmp.ne.s32.totalorder %s166, %s169
      %p175 = scmp.eq.s32.totalorder %s19, 0
      %p176 = por %p174, %p175
      %p177 = scmp.ne.s32.totalorder %s166, %s169
      %p178 = scmp.eq.s32.totalorder %s24, 1
      %p179 = por %p177, %p178
      %p180 = scmp.ne.s32.totalorder %s169, %s170
      %p181 = scmp.eq.s32.totalorder %s24, 0
      %p182 = por %p180, %p181
      %p183 = scmp.ne.s32.totalorder %s169, %s170
      %p184 = scmp.eq.s32.totalorder %s25, 1
      %p185 = por %p183, %p184
      %p187 = scmp.ne.s32.totalorder %s170, %s186
      %p188 = scmp.eq.s32.totalorder %s25, 0
      %p189 = por %p187, %p188
      %p190 = scmp.le.s32.totalorder 1, %s19
      %p191 = scmp.lt.s32.totalorder %s19, 3
      %p192 = pnand %p190, %p191
      %p193 = pneg %p192
      // Predicated region
      $region9: #{tpu_custom_call.1} parent=5 // pred_check
        _
      $region10: #{tpu_custom_call.1} parent=5 // pred_check_branch
        %195 = sbr.rel (%p192) target = $region12
      $region11: #{tpu_custom_call.1} parent=5 // pred_region
        %s196 = ssub.s32 %s19, 1
        // Predicated region
        $region13: #{tpu_custom_call.1} parent=11 // pred_check
          %p197 = pneg %p83
        $region14: #{tpu_custom_call.1} parent=11 // pred_check_branch
          %199 = sbr.rel (%p197) target = $region16
        $region15: #{tpu_custom_call.1} parent=11 // pred_region
          %s200 = smul.u32 4, %s29
          %s202 = ssub.s32 8192, 8192
          %203 = vsyncadd [#allocation7], %s202
          %s204 = smul.addr %s200, 64
          %s205 = scalar_lea.hbm %s1, %s204
          %s206 = sshll.u32 [#allocation6], 4
          %s207 = int_to_ptr.vmem [resolvable:$true] %s206
          %212 = dma.hbm_to_vmem [thread:$0]  %s205, 8192, %s207, [#allocation7], 256, 256, 16
        $region16: #{tpu_custom_call.1} parent=11 // pred_fallthru
          _
        // Predicated region
        $region17: #{tpu_custom_call.1} parent=11 // pred_check
          %p213 = pneg %p109
        $region18: #{tpu_custom_call.1} parent=11 // pred_check_branch
          %215 = sbr.rel (%p213) target = $region20
        $region19: #{tpu_custom_call.1} parent=11 // pred_region
          %s216 = smul.u32 4, %s29
          %s218 = ssub.s32 64, 64
          %219 = vsyncadd [#allocation7], %s218
          %s220 = smul.addr %s216, 16
          %s221 = scalar_lea.hbm %s2, %s220
          %s223 = sshll.u32 [#allocation8], 4
          %s224 = int_to_ptr.vmem [resolvable:$true] %s223
          %226 = dma.hbm_to_vmem [thread:$0]  %s221, 64, %s224, [#allocation7]
        $region20: #{tpu_custom_call.1} parent=11 // pred_fallthru
          _
        // Predicated region
        $region21: #{tpu_custom_call.1} parent=11 // pred_check
          %p227 = pneg %p135
        $region22: #{tpu_custom_call.1} parent=11 // pred_check_branch
          %229 = sbr.rel (%p227) target = $region24
        $region23: #{tpu_custom_call.1} parent=11 // pred_region
          %s230 = smul.u32 64, %s29
          %s232 = ssub.s32 8192, 8192
          %233 = vsyncadd [#allocation10], %s232
          %s234 = smul.addr %s230, 2
          %s235 = smul.addr %s234, 64
          %s236 = scalar_lea.hbm %s3, %s235
          %s237 = sshll.u32 [#allocation9], 4
          %s238 = int_to_ptr.vmem [resolvable:$true] %s237
          %243 = dma.hbm_to_vmem [thread:$0]  %s236, 8192, %s238, [#allocation10], 128, 128, 8
        $region24: #{tpu_custom_call.1} parent=11 // pred_fallthru
          _
        // Predicated region
        $region25: #{tpu_custom_call.1} parent=11 // pred_check
          %p244 = pneg %p156
        $region26: #{tpu_custom_call.1} parent=11 // pred_check_branch
          %246 = sbr.rel (%p244) target = $region28
        $region27: #{tpu_custom_call.1} parent=11 // pred_region
          _
        $region28: #{tpu_custom_call.1} parent=11 // pred_fallthru
          _
      $region12: #{tpu_custom_call.1} parent=5 // pred_fallthru
        _
      %p247 = scmp.lt.s32.totalorder %s19, 2
      // Predicated region
      $region29: #{tpu_custom_call.1} parent=5 // pred_check
        %p248 = pneg %p247
      $region30: #{tpu_custom_call.1} parent=5 // pred_check_branch
        %250 = sbr.rel (%p248) target = $region32
      $region31: #{tpu_custom_call.1} parent=5 // pred_region
        // Predicated region
        $region33: #{tpu_custom_call.1} parent=31 // pred_check
          %p251 = pneg %p51
        $region34: #{tpu_custom_call.1} parent=31 // pred_check_branch
          %253 = sbr.rel (%p251) target = $region36
        $region35: #{tpu_custom_call.1} parent=31 // pred_region
          %s254 = sand.u32 %s41, 1
          %s255 = scalar_lea.sflag [#allocation4], %s254
          %s256 = sand.u32 %s41, 1
          %s257 = smul.addr %s256, 16
          %s258 = scalar_lea.vmem [#allocation3], %s257
          %s260 = ssub.s32 256, 256
          %261 = vsyncadd %s255, %s260
          %s262 = smul.addr %s26, 2
          %s263 = smul.addr %s262, 128
          %s264 = scalar_lea.hbm %s0, %s263
          %s266 = sshll.u32 %s258, 4
          %s267 = int_to_ptr.vmem [resolvable:$true] %s266
          %269 = dma.hbm_to_vmem [thread:$0]  %s264, 256, %s267, %s255
        $region36: #{tpu_custom_call.1} parent=31 // pred_fallthru
          _
      $region32: #{tpu_custom_call.1} parent=5 // pred_fallthru
        _
      %p270 = scmp.le.s32.totalorder 1, %s19
      %p271 = scmp.lt.s32.totalorder %s19, 3
      %p272 = pnand %p270, %p271
      %p273 = pneg %p272
      // Predicated region
      $region37: #{tpu_custom_call.1} parent=5 // pred_check
        _
      $region38: #{tpu_custom_call.1} parent=5 // pred_check_branch
        %275 = sbr.rel (%p272) target = $region40
      $region39: #{tpu_custom_call.1} parent=5 // pred_region
        %s276 = ssub.s32 %s19, 1
        %s277 = sand.u32 %s44, 1
        %s278 = scalar_lea.sflag [#allocation4], %s277
        %s279 = sand.u32 %s44, 1
        %s280 = smul.addr %s279, 16
        %s281 = scalar_lea.vmem [#allocation3], %s280
        // Predicated region
        $region41: #{tpu_custom_call.1} parent=39 // pred_check
          %p282 = pneg %p57
        $region42: #{tpu_custom_call.1} parent=39 // pred_check_branch
          %284 = sbr.rel (%p282) target = $region44
        $region43: #{tpu_custom_call.1} parent=39 // pred_region
          %285 = dma.done %s278, 256
        $region44: #{tpu_custom_call.1} parent=39 // pred_fallthru
          _
        // Predicated region
        $region45: #{tpu_custom_call.1} parent=39 // pred_check
          %p286 = pneg %p83
        $region46: #{tpu_custom_call.1} parent=39 // pred_check_branch
          %288 = sbr.rel (%p286) target = $region48
        $region47: #{tpu_custom_call.1} parent=39 // pred_region
          %289 = dma.done [#allocation7], 8192
        $region48: #{tpu_custom_call.1} parent=39 // pred_fallthru
          _
        // Predicated region
        $region49: #{tpu_custom_call.1} parent=39 // pred_check
          %p290 = pneg %p109
        $region50: #{tpu_custom_call.1} parent=39 // pred_check_branch
          %292 = sbr.rel (%p290) target = $region52
        $region51: #{tpu_custom_call.1} parent=39 // pred_region
          %293 = dma.done [#allocation7], 64
        $region52: #{tpu_custom_call.1} parent=39 // pred_fallthru
          _
        // Predicated region
        $region53: #{tpu_custom_call.1} parent=39 // pred_check
          %p294 = pneg %p135
        $region54: #{tpu_custom_call.1} parent=39 // pred_check_branch
          %296 = sbr.rel (%p294) target = $region56
        $region55: #{tpu_custom_call.1} parent=39 // pred_region
          %297 = dma.done [#allocation10], 8192
        $region56: #{tpu_custom_call.1} parent=39 // pred_fallthru
          _
        %s298 = sand.u32 %s44, 1
        %s299 = scalar_lea.sflag [#allocation4], %s298
        %s300 = sand.u32 %s44, 1
        %s301 = smul.addr %s300, 16
        %s302 = scalar_lea.vmem [#allocation3], %s301
        %p303 = pneg %p57
        %p304 = pneg %p54
        %p305 = pneg %p83
        %p306 = pneg %p80
        %p307 = pneg %p109
        %p308 = pneg %p106
        %p309 = pneg %p135
        %p310 = pneg %p132
        %p311 = pneg %p156
        %p312 = pneg %p153
        %p313 = pneg %p182
        %p314 = pneg %p179
        %s315 = sand.u32 %s169, 1
        %s316 = scalar_lea.sflag [#allocation5], %s315
        %s317 = sand.u32 %s169, 1
        %s318 = smul.addr %s317, 16
        %s319 = scalar_lea.vmem [#allocation11], %s318
        %s320 = smul.u32 4, %s29
        %s321 = smul.u32 4, %s29
        %s322 = smul.u32 64, %s29
        %p323 = scmp.eq.s32.totalorder %s29, 0
        // Predicated region
        $region57: #{tpu_custom_call.1} parent=39 // pred_check
          %p324 = pneg %p323
        $region58: #{tpu_custom_call.1} parent=39 // pred_check_branch
          %326 = sbr.rel (%p324) target = $region60
        $region59: #{tpu_custom_call.1} parent=39 // pred_region
          %327 = vst [vmem:[#allocation2] sm:$0xff] 0.0
          %328 = vst [vmem:[#allocation2 + $0x8] sm:$0xff] 0.0
        $region60: #{tpu_custom_call.1} parent=39 // pred_fallthru
          _
        %v329 = vld [vmem:[%s281] sm:$0xff]
        %v330 = vld [vmem:[%s281 + $0x8] sm:$0xff]
        %v331 = vpack.c.bf16 %v329, %v329
        %v332 = vpack.c.bf16 %v330, %v330
        %v333 = vld [vmem:[#allocation6] sm:$0xff]
        %v334 = vld [vmem:[#allocation6 + $0x8] sm:$0xff]
        %v335 = vld [vmem:[#allocation6 + $0x10] sm:$0xff]
        %v336 = vld [vmem:[#allocation6 + $0x18] sm:$0xff]
        %v337 = vld [vmem:[#allocation6 + $0x20] sm:$0xff]
        %v338 = vld [vmem:[#allocation6 + $0x28] sm:$0xff]
        %v339 = vld [vmem:[#allocation6 + $0x30] sm:$0xff]
        %v340 = vld [vmem:[#allocation6 + $0x38] sm:$0xff]
        %v341 = vld [vmem:[#allocation6 + $0x40] sm:$0xff]
        %v342 = vld [vmem:[#allocation6 + $0x48] sm:$0xff]
        %v343 = vld [vmem:[#allocation6 + $0x50] sm:$0xff]
        %v344 = vld [vmem:[#allocation6 + $0x58] sm:$0xff]
        %v345 = vld [vmem:[#allocation6 + $0x60] sm:$0xff]
        %v346 = vld [vmem:[#allocation6 + $0x68] sm:$0xff]
        %v347 = vld [vmem:[#allocation6 + $0x70] sm:$0xff]
        %v348 = vld [vmem:[#allocation6 + $0x78] sm:$0xff]
        %v349 = vld [vmem:[#allocation6 + $0x80] sm:$0xff]
        %v350 = vld [vmem:[#allocation6 + $0x88] sm:$0xff]
        %v351 = vld [vmem:[#allocation6 + $0x90] sm:$0xff]
        %v352 = vld [vmem:[#allocation6 + $0x98] sm:$0xff]
        %v353 = vld [vmem:[#allocation6 + $0xa0] sm:$0xff]
        %v354 = vld [vmem:[#allocation6 + $0xa8] sm:$0xff]
        %v355 = vld [vmem:[#allocation6 + $0xb0] sm:$0xff]
        %v356 = vld [vmem:[#allocation6 + $0xb8] sm:$0xff]
        %v357 = vld [vmem:[#allocation6 + $0xc0] sm:$0xff]
        %v358 = vld [vmem:[#allocation6 + $0xc8] sm:$0xff]
        %v359 = vld [vmem:[#allocation6 + $0xd0] sm:$0xff]
        %v360 = vld [vmem:[#allocation6 + $0xd8] sm:$0xff]
        %v361 = vld [vmem:[#allocation6 + $0xe0] sm:$0xff]
        %v362 = vld [vmem:[#allocation6 + $0xe8] sm:$0xff]
        %v363 = vld [vmem:[#allocation6 + $0xf0] sm:$0xff]
        %v364 = vld [vmem:[#allocation6 + $0xf8] sm:$0xff]
        %v365 = vld [vmem:[#allocation6 + $0x100] sm:$0xff]
        %v366 = vld [vmem:[#allocation6 + $0x108] sm:$0xff]
        %v367 = vld [vmem:[#allocation6 + $0x110] sm:$0xff]
        %v368 = vld [vmem:[#allocation6 + $0x118] sm:$0xff]
        %v369 = vld [vmem:[#allocation6 + $0x120] sm:$0xff]
        %v370 = vld [vmem:[#allocation6 + $0x128] sm:$0xff]
        %v371 = vld [vmem:[#allocation6 + $0x130] sm:$0xff]
        %v372 = vld [vmem:[#allocation6 + $0x138] sm:$0xff]
        %v373 = vld [vmem:[#allocation6 + $0x140] sm:$0xff]
        %v374 = vld [vmem:[#allocation6 + $0x148] sm:$0xff]
        %v375 = vld [vmem:[#allocation6 + $0x150] sm:$0xff]
        %v376 = vld [vmem:[#allocation6 + $0x158] sm:$0xff]
        %v377 = vld [vmem:[#allocation6 + $0x160] sm:$0xff]
        %v378 = vld [vmem:[#allocation6 + $0x168] sm:$0xff]
        %v379 = vld [vmem:[#allocation6 + $0x170] sm:$0xff]
        %v380 = vld [vmem:[#allocation6 + $0x178] sm:$0xff]
        %v381 = vld [vmem:[#allocation6 + $0x180] sm:$0xff]
        %v382 = vld [vmem:[#allocation6 + $0x188] sm:$0xff]
        %v383 = vld [vmem:[#allocation6 + $0x190] sm:$0xff]
        %v384 = vld [vmem:[#allocation6 + $0x198] sm:$0xff]
        %v385 = vld [vmem:[#allocation6 + $0x1a0] sm:$0xff]
        %v386 = vld [vmem:[#allocation6 + $0x1a8] sm:$0xff]
        %v387 = vld [vmem:[#allocation6 + $0x1b0] sm:$0xff]
        %v388 = vld [vmem:[#allocation6 + $0x1b8] sm:$0xff]
        %v389 = vld [vmem:[#allocation6 + $0x1c0] sm:$0xff]
        %v390 = vld [vmem:[#allocation6 + $0x1c8] sm:$0xff]
        %v391 = vld [vmem:[#allocation6 + $0x1d0] sm:$0xff]
        %v392 = vld [vmem:[#allocation6 + $0x1d8] sm:$0xff]
        %v393 = vld [vmem:[#allocation6 + $0x1e0] sm:$0xff]
        %v394 = vld [vmem:[#allocation6 + $0x1e8] sm:$0xff]
        %v395 = vld [vmem:[#allocation6 + $0x1f0] sm:$0xff]
        %v396 = vld [vmem:[#allocation6 + $0x1f8] sm:$0xff]
        %v397 = vld [vmem:[#allocation8] sm:$0xf]
        %v399 = vlaneseq
        %v400 = vshrl.u32 %v399, 7
        %v401 = vsub.s32 0, %v400
        %v402 = vrot.slane %v397, %v401
        %v403 = vlaneseq
        %v404 = vshrl.u32 %v403, 7
        %v405 = vsub.s32 1, %v404
        %v406 = vrot.slane %v397, %v405
        %v407 = vlaneseq
        %v408 = vshrl.u32 %v407, 7
        %v409 = vsub.s32 2, %v408
        %v410 = vrot.slane %v397, %v409
        %v411 = vlaneseq
        %v412 = vshrl.u32 %v411, 7
        %v413 = vsub.s32 3, %v412
        %v414 = vrot.slane %v397, %v413
        %v483 = vunpack.c.l.b16 %v333
        %v484 = vunpack.c.h.b16 %v333
        %v485 = vunpack.c.l.b16 %v334
        %v486 = vunpack.c.h.b16 %v334
        %v487 = vunpack.c.l.b16 %v335
        %v488 = vunpack.c.h.b16 %v335
        %v489 = vunpack.c.l.b16 %v336
        %v490 = vunpack.c.h.b16 %v336
        %v491 = vunpack.c.l.b16 %v337
        %v492 = vunpack.c.h.b16 %v337
        %v493 = vunpack.c.l.b16 %v338
        %v494 = vunpack.c.h.b16 %v338
        %v495 = vunpack.c.l.b16 %v339
        %v496 = vunpack.c.h.b16 %v339
        %v497 = vunpack.c.l.b16 %v340
        %v498 = vunpack.c.h.b16 %v340
        %v499 = vunpack.c.l.b16 %v341
        %v500 = vunpack.c.h.b16 %v341
        %v501 = vunpack.c.l.b16 %v342
        %v502 = vunpack.c.h.b16 %v342
        %v503 = vunpack.c.l.b16 %v343
        %v504 = vunpack.c.h.b16 %v343
        %v505 = vunpack.c.l.b16 %v344
        %v506 = vunpack.c.h.b16 %v344
        %v507 = vunpack.c.l.b16 %v345
        %v508 = vunpack.c.h.b16 %v345
        %v509 = vunpack.c.l.b16 %v346
        %v510 = vunpack.c.h.b16 %v346
        %v511 = vunpack.c.l.b16 %v347
        %v512 = vunpack.c.h.b16 %v347
        %v513 = vunpack.c.l.b16 %v348
        %v514 = vunpack.c.h.b16 %v348
        %v515 = vunpack.c.l.b16 %v349
        %v516 = vunpack.c.h.b16 %v349
        %v517 = vunpack.c.l.b16 %v350
        %v518 = vunpack.c.h.b16 %v350
        %v519 = vunpack.c.l.b16 %v351
        %v520 = vunpack.c.h.b16 %v351
        %v521 = vunpack.c.l.b16 %v352
        %v522 = vunpack.c.h.b16 %v352
        %v523 = vunpack.c.l.b16 %v353
        %v524 = vunpack.c.h.b16 %v353
        %v525 = vunpack.c.l.b16 %v354
        %v526 = vunpack.c.h.b16 %v354
        %v527 = vunpack.c.l.b16 %v355
        %v528 = vunpack.c.h.b16 %v355
        %v529 = vunpack.c.l.b16 %v356
        %v530 = vunpack.c.h.b16 %v356
        %v531 = vunpack.c.l.b16 %v357
        %v532 = vunpack.c.h.b16 %v357
        %v533 = vunpack.c.l.b16 %v358
        %v534 = vunpack.c.h.b16 %v358
        %v535 = vunpack.c.l.b16 %v359
        %v536 = vunpack.c.h.b16 %v359
        %v537 = vunpack.c.l.b16 %v360
        %v538 = vunpack.c.h.b16 %v360
        %v539 = vunpack.c.l.b16 %v361
        %v540 = vunpack.c.h.b16 %v361
        %v541 = vunpack.c.l.b16 %v362
        %v542 = vunpack.c.h.b16 %v362
        %v543 = vunpack.c.l.b16 %v363
        %v544 = vunpack.c.h.b16 %v363
        %v545 = vunpack.c.l.b16 %v364
        %v546 = vunpack.c.h.b16 %v364
        %v547 = vunpack.c.l.b16 %v365
        %v548 = vunpack.c.h.b16 %v365
        %v549 = vunpack.c.l.b16 %v366
        %v550 = vunpack.c.h.b16 %v366
        %v551 = vunpack.c.l.b16 %v367
        %v552 = vunpack.c.h.b16 %v367
        %v553 = vunpack.c.l.b16 %v368
        %v554 = vunpack.c.h.b16 %v368
        %v555 = vunpack.c.l.b16 %v369
        %v556 = vunpack.c.h.b16 %v369
        %v557 = vunpack.c.l.b16 %v370
        %v558 = vunpack.c.h.b16 %v370
        %v559 = vunpack.c.l.b16 %v371
        %v560 = vunpack.c.h.b16 %v371
        %v561 = vunpack.c.l.b16 %v372
        %v562 = vunpack.c.h.b16 %v372
        %v563 = vunpack.c.l.b16 %v373
        %v564 = vunpack.c.h.b16 %v373
        %v565 = vunpack.c.l.b16 %v374
        %v566 = vunpack.c.h.b16 %v374
        %v567 = vunpack.c.l.b16 %v375
        %v568 = vunpack.c.h.b16 %v375
        %v569 = vunpack.c.l.b16 %v376
        %v570 = vunpack.c.h.b16 %v376
        %v571 = vunpack.c.l.b16 %v377
        %v572 = vunpack.c.h.b16 %v377
        %v573 = vunpack.c.l.b16 %v378
        %v574 = vunpack.c.h.b16 %v378
        %v575 = vunpack.c.l.b16 %v379
        %v576 = vunpack.c.h.b16 %v379
        %v577 = vunpack.c.l.b16 %v380
        %v578 = vunpack.c.h.b16 %v380
        %v579 = vunpack.c.l.b16 %v381
        %v580 = vunpack.c.h.b16 %v381
        %v581 = vunpack.c.l.b16 %v382
        %v582 = vunpack.c.h.b16 %v382
        %v583 = vunpack.c.l.b16 %v383
        %v584 = vunpack.c.h.b16 %v383
        %v585 = vunpack.c.l.b16 %v384
        %v586 = vunpack.c.h.b16 %v384
        %v587 = vunpack.c.l.b16 %v385
        %v588 = vunpack.c.h.b16 %v385
        %v589 = vunpack.c.l.b16 %v386
        %v590 = vunpack.c.h.b16 %v386
        %v591 = vunpack.c.l.b16 %v387
        %v592 = vunpack.c.h.b16 %v387
        %v593 = vunpack.c.l.b16 %v388
        %v594 = vunpack.c.h.b16 %v388
        %v595 = vunpack.c.l.b16 %v389
        %v596 = vunpack.c.h.b16 %v389
        %v597 = vunpack.c.l.b16 %v390
        %v598 = vunpack.c.h.b16 %v390
        %v599 = vunpack.c.l.b16 %v391
        %v600 = vunpack.c.h.b16 %v391
        %v601 = vunpack.c.l.b16 %v392
        %v602 = vunpack.c.h.b16 %v392
        %v603 = vunpack.c.l.b16 %v393
        %v604 = vunpack.c.h.b16 %v393
        %v605 = vunpack.c.l.b16 %v394
        %v606 = vunpack.c.h.b16 %v394
        %v607 = vunpack.c.l.b16 %v395
        %v608 = vunpack.c.h.b16 %v395
        %v609 = vunpack.c.l.b16 %v396
        %v610 = vunpack.c.h.b16 %v396
        %v611 = vpack.c.b16 %v487, %v483
        %v612 = vpack.c.b16 %v488, %v484
        %v613 = vpack.c.b16 %v489, %v485
        %v614 = vpack.c.b16 %v490, %v486
        %v615 = vpack.c.b16 %v495, %v491
        %v616 = vpack.c.b16 %v496, %v492
        %v617 = vpack.c.b16 %v497, %v493
        %v618 = vpack.c.b16 %v498, %v494
        %v619 = vpack.c.b16 %v503, %v499
        %v620 = vpack.c.b16 %v504, %v500
        %v621 = vpack.c.b16 %v505, %v501
        %v622 = vpack.c.b16 %v506, %v502
        %v623 = vpack.c.b16 %v511, %v507
        %v624 = vpack.c.b16 %v512, %v508
        %v625 = vpack.c.b16 %v513, %v509
        %v626 = vpack.c.b16 %v514, %v510
        %v627 = vpack.c.b16 %v519, %v515
        %v628 = vpack.c.b16 %v520, %v516
        %v629 = vpack.c.b16 %v521, %v517
        %v630 = vpack.c.b16 %v522, %v518
        %v631 = vpack.c.b16 %v527, %v523
        %v632 = vpack.c.b16 %v528, %v524
        %v633 = vpack.c.b16 %v529, %v525
        %v634 = vpack.c.b16 %v530, %v526
        %v635 = vpack.c.b16 %v535, %v531
        %v636 = vpack.c.b16 %v536, %v532
        %v637 = vpack.c.b16 %v537, %v533
        %v638 = vpack.c.b16 %v538, %v534
        %v639 = vpack.c.b16 %v543, %v539
        %v640 = vpack.c.b16 %v544, %v540
        %v641 = vpack.c.b16 %v545, %v541
        %v642 = vpack.c.b16 %v546, %v542
        %v643 = vpack.c.b16 %v551, %v547
        %v644 = vpack.c.b16 %v552, %v548
        %v645 = vpack.c.b16 %v553, %v549
        %v646 = vpack.c.b16 %v554, %v550
        %v647 = vpack.c.b16 %v559, %v555
        %v648 = vpack.c.b16 %v560, %v556
        %v649 = vpack.c.b16 %v561, %v557
        %v650 = vpack.c.b16 %v562, %v558
        %v651 = vpack.c.b16 %v567, %v563
        %v652 = vpack.c.b16 %v568, %v564
        %v653 = vpack.c.b16 %v569, %v565
        %v654 = vpack.c.b16 %v570, %v566
        %v655 = vpack.c.b16 %v575, %v571
        %v656 = vpack.c.b16 %v576, %v572
        %v657 = vpack.c.b16 %v577, %v573
        %v658 = vpack.c.b16 %v578, %v574
        %v659 = vpack.c.b16 %v583, %v579
        %v660 = vpack.c.b16 %v584, %v580
        %v661 = vpack.c.b16 %v585, %v581
        %v662 = vpack.c.b16 %v586, %v582
        %v663 = vpack.c.b16 %v591, %v587
        %v664 = vpack.c.b16 %v592, %v588
        %v665 = vpack.c.b16 %v593, %v589
        %v666 = vpack.c.b16 %v594, %v590
        %v667 = vpack.c.b16 %v599, %v595
        %v668 = vpack.c.b16 %v600, %v596
        %v669 = vpack.c.b16 %v601, %v597
        %v670 = vpack.c.b16 %v602, %v598
        %v671 = vpack.c.b16 %v607, %v603
        %v672 = vpack.c.b16 %v608, %v604
        %v673 = vpack.c.b16 %v609, %v605
        %v674 = vpack.c.b16 %v610, %v606
        %739 = vmatprep.subr.bf16.mxu0 %v640
        %740 = vmatpush1.bf16.msra.mxu0 %v639
        %741 = vmatprep.subr.bf16.mxu0 %v636
        %742 = vmatpush1.bf16.msra.mxu0 %v635
        %743 = vmatprep.subr.bf16.mxu0 %v632
        %744 = vmatpush1.bf16.msra.mxu0 %v631
        %745 = vmatprep.subr.bf16.mxu0 %v628
        %746 = vmatpush1.bf16.msra.mxu0 %v627
        %747 = vmatprep.subr.bf16.mxu0 %v624
        %748 = vmatpush1.bf16.msra.mxu0 %v623
        %749 = vmatprep.subr.bf16.mxu0 %v620
        %750 = vmatpush1.bf16.msra.mxu0 %v619
        %751 = vmatprep.subr.bf16.mxu0 %v616
        %752 = vmatpush1.bf16.msra.mxu0 %v615
        %753 = vmatprep.subr.bf16.mxu0 %v612
        %754 = vmatpush1.bf16.msra.mxu0 %v611
        %755 = vmatprep.subr.bf16.mxu0 %v672
        %756 = vmatpush2.bf16.msra.mxu0 %v671
        %757 = vmatprep.subr.bf16.mxu0 %v668
        %758 = vmatpush2.bf16.msra.mxu0 %v667
        %759 = vmatprep.subr.bf16.mxu0 %v664
        %760 = vmatpush2.bf16.msra.mxu0 %v663
        %761 = vmatprep.subr.bf16.mxu0 %v660
        %762 = vmatpush2.bf16.msra.mxu0 %v659
        %763 = vmatprep.subr.bf16.mxu0 %v656
        %764 = vmatpush2.bf16.msra.mxu0 %v655
        %765 = vmatprep.subr.bf16.mxu0 %v652
        %766 = vmatpush2.bf16.msra.mxu0 %v651
        %767 = vmatprep.subr.bf16.mxu0 %v648
        %768 = vmatpush2.bf16.msra.mxu0 %v647
        %769 = vmatprep.subr.bf16.mxu0 %v644
        %770 = vmatpush2.bf16.msra.mxu0 %v643
        %771 = vmatprep.mubr.bf16.mxu0 %v332
        %772 = vmatmul.mubr.bf16.gmra.mxu0 %v331
        %v773 = vpop.f32.mrf.mxu0
        %v774 = vadd.f32 %v402, %v773
        %v775 = vpop.f32.mrf.mxu0
        %v776 = vadd.f32 %v406, %v775
        %v777 = vpop.f32.mrf.mxu0
        %v778 = vpop.f32.mrf.mxu0
        %779 = vdwg.mxu0
        %780 = vmatprep.subr.bf16.mxu0 %v642
        %781 = vmatpush1.bf16.msra.mxu0 %v641
        %782 = vmatprep.subr.bf16.mxu0 %v638
        %783 = vmatpush1.bf16.msra.mxu0 %v637
        %784 = vmatprep.subr.bf16.mxu0 %v634
        %785 = vmatpush1.bf16.msra.mxu0 %v633
        %786 = vmatprep.subr.bf16.mxu0 %v630
        %787 = vmatpush1.bf16.msra.mxu0 %v629
        %788 = vmatprep.subr.bf16.mxu0 %v626
        %789 = vmatpush1.bf16.msra.mxu0 %v625
        %790 = vmatprep.subr.bf16.mxu0 %v622
        %791 = vmatpush1.bf16.msra.mxu0 %v621
        %792 = vmatprep.subr.bf16.mxu0 %v618
        %793 = vmatpush1.bf16.msra.mxu0 %v617
        %794 = vmatprep.subr.bf16.mxu0 %v614
        %795 = vmatpush1.bf16.msra.mxu0 %v613
        %796 = vmatprep.subr.bf16.mxu0 %v674
        %797 = vmatpush2.bf16.msra.mxu0 %v673
        %798 = vmatprep.subr.bf16.mxu0 %v670
        %799 = vmatpush2.bf16.msra.mxu0 %v669
        %800 = vmatprep.subr.bf16.mxu0 %v666
        %801 = vmatpush2.bf16.msra.mxu0 %v665
        %802 = vmatprep.subr.bf16.mxu0 %v662
        %803 = vmatpush2.bf16.msra.mxu0 %v661
        %804 = vmatprep.subr.bf16.mxu0 %v658
        %805 = vmatpush2.bf16.msra.mxu0 %v657
        %806 = vmatprep.subr.bf16.mxu0 %v654
        %807 = vmatpush2.bf16.msra.mxu0 %v653
        %808 = vmatprep.subr.bf16.mxu0 %v650
        %809 = vmatpush2.bf16.msra.mxu0 %v649
        %810 = vmatprep.subr.bf16.mxu0 %v646
        %811 = vmatpush2.bf16.msra.mxu0 %v645
        %812 = vmatprep.mubr.bf16.mxu0 %v332
        %813 = vmatmul.mubr.bf16.gmra.mxu0 %v331
        %v814 = vpop.f32.mrf.mxu0
        %v815 = vadd.f32 %v410, %v814
        %v816 = vpop.f32.mrf.mxu0
        %v817 = vadd.f32 %v414, %v816
        %v818 = vpop.f32.mrf.mxu0
        %v819 = vpop.f32.mrf.mxu0
        %820 = vdwg.mxu0
        %v821 = vmax.f32 %v774, 0.0
        %v822 = vmax.f32 %v776, 0.0
        %v823 = vmax.f32 %v815, 0.0
        %v824 = vmax.f32 %v817, 0.0
        %v825 = vld [vmem:[#allocation2] sm:$0xff]
        %v826 = vld [vmem:[#allocation2 + $0x8] sm:$0xff]
        %v827 = vpack.c.bf16 %v821, %v821
        %v828 = vpack.c.bf16 %v822, %v822
        %v829 = vpack.c.bf16 %v823, %v823
        %v830 = vpack.c.bf16 %v824, %v824
        %v831 = vld [vmem:[#allocation9] sm:$0xff]
        %v832 = vld [vmem:[#allocation9 + $0x8] sm:$0xff]
        %v833 = vld [vmem:[#allocation9 + $0x10] sm:$0xff]
        %v834 = vld [vmem:[#allocation9 + $0x18] sm:$0xff]
        %v835 = vld [vmem:[#allocation9 + $0x20] sm:$0xff]
        %v836 = vld [vmem:[#allocation9 + $0x28] sm:$0xff]
        %v837 = vld [vmem:[#allocation9 + $0x30] sm:$0xff]
        %v838 = vld [vmem:[#allocation9 + $0x38] sm:$0xff]
        %v839 = vld [vmem:[#allocation9 + $0x40] sm:$0xff]
        %v840 = vld [vmem:[#allocation9 + $0x48] sm:$0xff]
        %v841 = vld [vmem:[#allocation9 + $0x50] sm:$0xff]
        %v842 = vld [vmem:[#allocation9 + $0x58] sm:$0xff]
        %v843 = vld [vmem:[#allocation9 + $0x60] sm:$0xff]
        %v844 = vld [vmem:[#allocation9 + $0x68] sm:$0xff]
        %v845 = vld [vmem:[#allocation9 + $0x70] sm:$0xff]
        %v846 = vld [vmem:[#allocation9 + $0x78] sm:$0xff]
        %v847 = vld [vmem:[#allocation9 + $0x80] sm:$0xff]
        %v848 = vld [vmem:[#allocation9 + $0x88] sm:$0xff]
        %v849 = vld [vmem:[#allocation9 + $0x90] sm:$0xff]
        %v850 = vld [vmem:[#allocation9 + $0x98] sm:$0xff]
        %v851 = vld [vmem:[#allocation9 + $0xa0] sm:$0xff]
        %v852 = vld [vmem:[#allocation9 + $0xa8] sm:$0xff]
        %v853 = vld [vmem:[#allocation9 + $0xb0] sm:$0xff]
        %v854 = vld [vmem:[#allocation9 + $0xb8] sm:$0xff]
        %v855 = vld [vmem:[#allocation9 + $0xc0] sm:$0xff]
        %v856 = vld [vmem:[#allocation9 + $0xc8] sm:$0xff]
        %v857 = vld [vmem:[#allocation9 + $0xd0] sm:$0xff]
        %v858 = vld [vmem:[#allocation9 + $0xd8] sm:$0xff]
        %v859 = vld [vmem:[#allocation9 + $0xe0] sm:$0xff]
        %v860 = vld [vmem:[#allocation9 + $0xe8] sm:$0xff]
        %v861 = vld [vmem:[#allocation9 + $0xf0] sm:$0xff]
        %v862 = vld [vmem:[#allocation9 + $0xf8] sm:$0xff]
        %v863 = vld [vmem:[#allocation9 + $0x100] sm:$0xff]
        %v864 = vld [vmem:[#allocation9 + $0x108] sm:$0xff]
        %v865 = vld [vmem:[#allocation9 + $0x110] sm:$0xff]
        %v866 = vld [vmem:[#allocation9 + $0x118] sm:$0xff]
        %v867 = vld [vmem:[#allocation9 + $0x120] sm:$0xff]
        %v868 = vld [vmem:[#allocation9 + $0x128] sm:$0xff]
        %v869 = vld [vmem:[#allocation9 + $0x130] sm:$0xff]
        %v870 = vld [vmem:[#allocation9 + $0x138] sm:$0xff]
        %v871 = vld [vmem:[#allocation9 + $0x140] sm:$0xff]
        %v872 = vld [vmem:[#allocation9 + $0x148] sm:$0xff]
        %v873 = vld [vmem:[#allocation9 + $0x150] sm:$0xff]
        %v874 = vld [vmem:[#allocation9 + $0x158] sm:$0xff]
        %v875 = vld [vmem:[#allocation9 + $0x160] sm:$0xff]
        %v876 = vld [vmem:[#allocation9 + $0x168] sm:$0xff]
        %v877 = vld [vmem:[#allocation9 + $0x170] sm:$0xff]
        %v878 = vld [vmem:[#allocation9 + $0x178] sm:$0xff]
        %v879 = vld [vmem:[#allocation9 + $0x180] sm:$0xff]
        %v880 = vld [vmem:[#allocation9 + $0x188] sm:$0xff]
        %v881 = vld [vmem:[#allocation9 + $0x190] sm:$0xff]
        %v882 = vld [vmem:[#allocation9 + $0x198] sm:$0xff]
        %v883 = vld [vmem:[#allocation9 + $0x1a0] sm:$0xff]
        %v884 = vld [vmem:[#allocation9 + $0x1a8] sm:$0xff]
        %v885 = vld [vmem:[#allocation9 + $0x1b0] sm:$0xff]
        %v886 = vld [vmem:[#allocation9 + $0x1b8] sm:$0xff]
        %v887 = vld [vmem:[#allocation9 + $0x1c0] sm:$0xff]
        %v888 = vld [vmem:[#allocation9 + $0x1c8] sm:$0xff]
        %v889 = vld [vmem:[#allocation9 + $0x1d0] sm:$0xff]
        %v890 = vld [vmem:[#allocation9 + $0x1d8] sm:$0xff]
        %v891 = vld [vmem:[#allocation9 + $0x1e0] sm:$0xff]
        %v892 = vld [vmem:[#allocation9 + $0x1e8] sm:$0xff]
        %v893 = vld [vmem:[#allocation9 + $0x1f0] sm:$0xff]
        %v894 = vld [vmem:[#allocation9 + $0x1f8] sm:$0xff]
        %v959 = vunpack.c.l.b16 %v831
        %v960 = vunpack.c.h.b16 %v831
        %v961 = vunpack.c.l.b16 %v832
        %v962 = vunpack.c.h.b16 %v832
        %v963 = vunpack.c.l.b16 %v833
        %v964 = vunpack.c.h.b16 %v833
        %v965 = vunpack.c.l.b16 %v834
        %v966 = vunpack.c.h.b16 %v834
        %v967 = vunpack.c.l.b16 %v835
        %v968 = vunpack.c.h.b16 %v835
        %v969 = vunpack.c.l.b16 %v836
        %v970 = vunpack.c.h.b16 %v836
        %v971 = vunpack.c.l.b16 %v837
        %v972 = vunpack.c.h.b16 %v837
        %v973 = vunpack.c.l.b16 %v838
        %v974 = vunpack.c.h.b16 %v838
        %v975 = vunpack.c.l.b16 %v839
        %v976 = vunpack.c.h.b16 %v839
        %v977 = vunpack.c.l.b16 %v840
        %v978 = vunpack.c.h.b16 %v840
        %v979 = vunpack.c.l.b16 %v841
        %v980 = vunpack.c.h.b16 %v841
        %v981 = vunpack.c.l.b16 %v842
        %v982 = vunpack.c.h.b16 %v842
        %v983 = vunpack.c.l.b16 %v843
        %v984 = vunpack.c.h.b16 %v843
        %v985 = vunpack.c.l.b16 %v844
        %v986 = vunpack.c.h.b16 %v844
        %v987 = vunpack.c.l.b16 %v845
        %v988 = vunpack.c.h.b16 %v845
        %v989 = vunpack.c.l.b16 %v846
        %v990 = vunpack.c.h.b16 %v846
        %v991 = vunpack.c.l.b16 %v847
        %v992 = vunpack.c.h.b16 %v847
        %v993 = vunpack.c.l.b16 %v848
        %v994 = vunpack.c.h.b16 %v848
        %v995 = vunpack.c.l.b16 %v849
        %v996 = vunpack.c.h.b16 %v849
        %v997 = vunpack.c.l.b16 %v850
        %v998 = vunpack.c.h.b16 %v850
        %v999 = vunpack.c.l.b16 %v851
        %v1000 = vunpack.c.h.b16 %v851
        %v1001 = vunpack.c.l.b16 %v852
        %v1002 = vunpack.c.h.b16 %v852
        %v1003 = vunpack.c.l.b16 %v853
        %v1004 = vunpack.c.h.b16 %v853
        %v1005 = vunpack.c.l.b16 %v854
        %v1006 = vunpack.c.h.b16 %v854
        %v1007 = vunpack.c.l.b16 %v855
        %v1008 = vunpack.c.h.b16 %v855
        %v1009 = vunpack.c.l.b16 %v856
        %v1010 = vunpack.c.h.b16 %v856
        %v1011 = vunpack.c.l.b16 %v857
        %v1012 = vunpack.c.h.b16 %v857
        %v1013 = vunpack.c.l.b16 %v858
        %v1014 = vunpack.c.h.b16 %v858
        %v1015 = vunpack.c.l.b16 %v859
        %v1016 = vunpack.c.h.b16 %v859
        %v1017 = vunpack.c.l.b16 %v860
        %v1018 = vunpack.c.h.b16 %v860
        %v1019 = vunpack.c.l.b16 %v861
        %v1020 = vunpack.c.h.b16 %v861
        %v1021 = vunpack.c.l.b16 %v862
        %v1022 = vunpack.c.h.b16 %v862
        %v1023 = vunpack.c.l.b16 %v863
        %v1024 = vunpack.c.h.b16 %v863
        %v1025 = vunpack.c.l.b16 %v864
        %v1026 = vunpack.c.h.b16 %v864
        %v1027 = vunpack.c.l.b16 %v865
        %v1028 = vunpack.c.h.b16 %v865
        %v1029 = vunpack.c.l.b16 %v866
        %v1030 = vunpack.c.h.b16 %v866
        %v1031 = vunpack.c.l.b16 %v867
        %v1032 = vunpack.c.h.b16 %v867
        %v1033 = vunpack.c.l.b16 %v868
        %v1034 = vunpack.c.h.b16 %v868
        %v1035 = vunpack.c.l.b16 %v869
        %v1036 = vunpack.c.h.b16 %v869
        %v1037 = vunpack.c.l.b16 %v870
        %v1038 = vunpack.c.h.b16 %v870
        %v1039 = vunpack.c.l.b16 %v871
        %v1040 = vunpack.c.h.b16 %v871
        %v1041 = vunpack.c.l.b16 %v872
        %v1042 = vunpack.c.h.b16 %v872
        %v1043 = vunpack.c.l.b16 %v873
        %v1044 = vunpack.c.h.b16 %v873
        %v1045 = vunpack.c.l.b16 %v874
        %v1046 = vunpack.c.h.b16 %v874
        %v1047 = vunpack.c.l.b16 %v875
        %v1048 = vunpack.c.h.b16 %v875
        %v1049 = vunpack.c.l.b16 %v876
        %v1050 = vunpack.c.h.b16 %v876
        %v1051 = vunpack.c.l.b16 %v877
        %v1052 = vunpack.c.h.b16 %v877
        %v1053 = vunpack.c.l.b16 %v878
        %v1054 = vunpack.c.h.b16 %v878
        %v1055 = vunpack.c.l.b16 %v879
        %v1056 = vunpack.c.h.b16 %v879
        %v1057 = vunpack.c.l.b16 %v880
        %v1058 = vunpack.c.h.b16 %v880
        %v1059 = vunpack.c.l.b16 %v881
        %v1060 = vunpack.c.h.b16 %v881
        %v1061 = vunpack.c.l.b16 %v882
        %v1062 = vunpack.c.h.b16 %v882
        %v1063 = vunpack.c.l.b16 %v883
        %v1064 = vunpack.c.h.b16 %v883
        %v1065 = vunpack.c.l.b16 %v884
        %v1066 = vunpack.c.h.b16 %v884
        %v1067 = vunpack.c.l.b16 %v885
        %v1068 = vunpack.c.h.b16 %v885
        %v1069 = vunpack.c.l.b16 %v886
        %v1070 = vunpack.c.h.b16 %v886
        %v1071 = vunpack.c.l.b16 %v887
        %v1072 = vunpack.c.h.b16 %v887
        %v1073 = vunpack.c.l.b16 %v888
        %v1074 = vunpack.c.h.b16 %v888
        %v1075 = vunpack.c.l.b16 %v889
        %v1076 = vunpack.c.h.b16 %v889
        %v1077 = vunpack.c.l.b16 %v890
        %v1078 = vunpack.c.h.b16 %v890
        %v1079 = vunpack.c.l.b16 %v891
        %v1080 = vunpack.c.h.b16 %v891
        %v1081 = vunpack.c.l.b16 %v892
        %v1082 = vunpack.c.h.b16 %v892
        %v1083 = vunpack.c.l.b16 %v893
        %v1084 = vunpack.c.h.b16 %v893
        %v1085 = vunpack.c.l.b16 %v894
        %v1086 = vunpack.c.h.b16 %v894
        %v1087 = vpack.c.b16 %v961, %v959
        %v1088 = vpack.c.b16 %v962, %v960
        %v1089 = vpack.c.b16 %v965, %v963
        %v1090 = vpack.c.b16 %v966, %v964
        %v1091 = vpack.c.b16 %v969, %v967
        %v1092 = vpack.c.b16 %v970, %v968
        %v1093 = vpack.c.b16 %v973, %v971
        %v1094 = vpack.c.b16 %v974, %v972
        %v1095 = vpack.c.b16 %v977, %v975
        %v1096 = vpack.c.b16 %v978, %v976
        %v1097 = vpack.c.b16 %v981, %v979
        %v1098 = vpack.c.b16 %v982, %v980
        %v1099 = vpack.c.b16 %v985, %v983
        %v1100 = vpack.c.b16 %v986, %v984
        %v1101 = vpack.c.b16 %v989, %v987
        %v1102 = vpack.c.b16 %v990, %v988
        %v1103 = vpack.c.b16 %v993, %v991
        %v1104 = vpack.c.b16 %v994, %v992
        %v1105 = vpack.c.b16 %v997, %v995
        %v1106 = vpack.c.b16 %v998, %v996
        %v1107 = vpack.c.b16 %v1001, %v999
        %v1108 = vpack.c.b16 %v1002, %v1000
        %v1109 = vpack.c.b16 %v1005, %v1003
        %v1110 = vpack.c.b16 %v1006, %v1004
        %v1111 = vpack.c.b16 %v1009, %v1007
        %v1112 = vpack.c.b16 %v1010, %v1008
        %v1113 = vpack.c.b16 %v1013, %v1011
        %v1114 = vpack.c.b16 %v1014, %v1012
        %v1115 = vpack.c.b16 %v1017, %v1015
        %v1116 = vpack.c.b16 %v1018, %v1016
        %v1117 = vpack.c.b16 %v1021, %v1019
        %v1118 = vpack.c.b16 %v1022, %v1020
        %v1119 = vpack.c.b16 %v1025, %v1023
        %v1120 = vpack.c.b16 %v1026, %v1024
        %v1121 = vpack.c.b16 %v1029, %v1027
        %v1122 = vpack.c.b16 %v1030, %v1028
        %v1123 = vpack.c.b16 %v1033, %v1031
        %v1124 = vpack.c.b16 %v1034, %v1032
        %v1125 = vpack.c.b16 %v1037, %v1035
        %v1126 = vpack.c.b16 %v1038, %v1036
        %v1127 = vpack.c.b16 %v1041, %v1039
        %v1128 = vpack.c.b16 %v1042, %v1040
        %v1129 = vpack.c.b16 %v1045, %v1043
        %v1130 = vpack.c.b16 %v1046, %v1044
        %v1131 = vpack.c.b16 %v1049, %v1047
        %v1132 = vpack.c.b16 %v1050, %v1048
        %v1133 = vpack.c.b16 %v1053, %v1051
        %v1134 = vpack.c.b16 %v1054, %v1052
        %v1135 = vpack.c.b16 %v1057, %v1055
        %v1136 = vpack.c.b16 %v1058, %v1056
        %v1137 = vpack.c.b16 %v1061, %v1059
        %v1138 = vpack.c.b16 %v1062, %v1060
        %v1139 = vpack.c.b16 %v1065, %v1063
        %v1140 = vpack.c.b16 %v1066, %v1064
        %v1141 = vpack.c.b16 %v1069, %v1067
        %v1142 = vpack.c.b16 %v1070, %v1068
        %v1143 = vpack.c.b16 %v1073, %v1071
        %v1144 = vpack.c.b16 %v1074, %v1072
        %v1145 = vpack.c.b16 %v1077, %v1075
        %v1146 = vpack.c.b16 %v1078, %v1076
        %v1147 = vpack.c.b16 %v1081, %v1079
        %v1148 = vpack.c.b16 %v1082, %v1080
        %v1149 = vpack.c.b16 %v1085, %v1083
        %v1150 = vpack.c.b16 %v1086, %v1084
        %1215 = vmatprep.subr.bf16.mxu0 %v1102
        %1216 = vmatpush1.bf16.msra.mxu0 %v1101
        %1217 = vmatprep.subr.bf16.mxu0 %v1100
        %1218 = vmatpush1.bf16.msra.mxu0 %v1099
        %1219 = vmatprep.subr.bf16.mxu0 %v1098
        %1220 = vmatpush1.bf16.msra.mxu0 %v1097
        %1221 = vmatprep.subr.bf16.mxu0 %v1096
        %1222 = vmatpush1.bf16.msra.mxu0 %v1095
        %1223 = vmatprep.subr.bf16.mxu0 %v1094
        %1224 = vmatpush1.bf16.msra.mxu0 %v1093
        %1225 = vmatprep.subr.bf16.mxu0 %v1092
        %1226 = vmatpush1.bf16.msra.mxu0 %v1091
        %1227 = vmatprep.subr.bf16.mxu0 %v1090
        %1228 = vmatpush1.bf16.msra.mxu0 %v1089
        %1229 = vmatprep.subr.bf16.mxu0 %v1088
        %1230 = vmatpush1.bf16.msra.mxu0 %v1087
        %1231 = vmatprep.subr.bf16.mxu0 %v1118
        %1232 = vmatpush2.bf16.msra.mxu0 %v1117
        %1233 = vmatprep.subr.bf16.mxu0 %v1116
        %1234 = vmatpush2.bf16.msra.mxu0 %v1115
        %1235 = vmatprep.subr.bf16.mxu0 %v1114
        %1236 = vmatpush2.bf16.msra.mxu0 %v1113
        %1237 = vmatprep.subr.bf16.mxu0 %v1112
        %1238 = vmatpush2.bf16.msra.mxu0 %v1111
        %1239 = vmatprep.subr.bf16.mxu0 %v1110
        %1240 = vmatpush2.bf16.msra.mxu0 %v1109
        %1241 = vmatprep.subr.bf16.mxu0 %v1108
        %1242 = vmatpush2.bf16.msra.mxu0 %v1107
        %1243 = vmatprep.subr.bf16.mxu0 %v1106
        %1244 = vmatpush2.bf16.msra.mxu0 %v1105
        %1245 = vmatprep.subr.bf16.mxu0 %v1104
        %1246 = vmatpush2.bf16.msra.mxu0 %v1103
        %1247 = vmatprep.mubr.bf16.mxu0 %v828
        %1248 = vmatmul.mubr.bf16.gmra.mxu0 %v827
        %v1249 = vpop.f32.mrf.mxu0
        %v1250 = vadd.f32 0.0, %v1249
        %v1251 = vpop.f32.mrf.mxu0
        %v1252 = vadd.f32 0.0, %v1251
        %v1253 = vpop.f32.mrf.mxu0
        %v1254 = vpop.f32.mrf.mxu0
        %1255 = vdwg.mxu0
        %1256 = vmatprep.subr.bf16.mxu0 %v1134
        %1257 = vmatpush1.bf16.msra.mxu0 %v1133
        %1258 = vmatprep.subr.bf16.mxu0 %v1132
        %1259 = vmatpush1.bf16.msra.mxu0 %v1131
        %1260 = vmatprep.subr.bf16.mxu0 %v1130
        %1261 = vmatpush1.bf16.msra.mxu0 %v1129
        %1262 = vmatprep.subr.bf16.mxu0 %v1128
        %1263 = vmatpush1.bf16.msra.mxu0 %v1127
        %1264 = vmatprep.subr.bf16.mxu0 %v1126
        %1265 = vmatpush1.bf16.msra.mxu0 %v1125
        %1266 = vmatprep.subr.bf16.mxu0 %v1124
        %1267 = vmatpush1.bf16.msra.mxu0 %v1123
        %1268 = vmatprep.subr.bf16.mxu0 %v1122
        %1269 = vmatpush1.bf16.msra.mxu0 %v1121
        %1270 = vmatprep.subr.bf16.mxu0 %v1120
        %1271 = vmatpush1.bf16.msra.mxu0 %v1119
        %1272 = vmatprep.subr.bf16.mxu0 %v1150
        %1273 = vmatpush2.bf16.msra.mxu0 %v1149
        %1274 = vmatprep.subr.bf16.mxu0 %v1148
        %1275 = vmatpush2.bf16.msra.mxu0 %v1147
        %1276 = vmatprep.subr.bf16.mxu0 %v1146
        %1277 = vmatpush2.bf16.msra.mxu0 %v1145
        %1278 = vmatprep.subr.bf16.mxu0 %v1144
        %1279 = vmatpush2.bf16.msra.mxu0 %v1143
        %1280 = vmatprep.subr.bf16.mxu0 %v1142
        %1281 = vmatpush2.bf16.msra.mxu0 %v1141
        %1282 = vmatprep.subr.bf16.mxu0 %v1140
        %1283 = vmatpush2.bf16.msra.mxu0 %v1139
        %1284 = vmatprep.subr.bf16.mxu0 %v1138
        %1285 = vmatpush2.bf16.msra.mxu0 %v1137
        %1286 = vmatprep.subr.bf16.mxu0 %v1136
        %1287 = vmatpush2.bf16.msra.mxu0 %v1135
        %1288 = vmatprep.mubr.bf16.mxu0 %v830
        %1289 = vmatmul.mubr.bf16.gmra.mxu0 %v829
        %v1290 = vpop.f32.mrf.mxu0
        %v1291 = vadd.f32 %v1250, %v1290
        %v1292 = vpop.f32.mrf.mxu0
        %v1293 = vadd.f32 %v1252, %v1292
        %v1294 = vpop.f32.mrf.mxu0
        %v1295 = vpop.f32.mrf.mxu0
        %1296 = vdwg.mxu0
        %v1297 = vadd.f32 %v825, %v1291
        %v1298 = vadd.f32 %v826, %v1293
        %1299 = vst [vmem:[#allocation2] sm:$0xff] %v1297
        %1300 = vst [vmem:[#allocation2 + $0x8] sm:$0xff] %v1298
        // Predicated region
        $region61: #{tpu_custom_call.1} parent=39 // pred_check
          %p1301 = pneg %p323
        $region62: #{tpu_custom_call.1} parent=39 // pred_check_branch
          %1303 = sbr.rel (%p1301) target = $region64
        $region63: #{tpu_custom_call.1} parent=39 // pred_region
          %v1304 = vld [vmem:[#allocation2] sm:$0xff]
          %v1305 = vld [vmem:[#allocation2 + $0x8] sm:$0xff]
          %v1306 = vld [vmem:[%s4] sm:$0x3]
          %v1308 = vlaneseq
          %v1309 = vshrl.u32 %v1308, 7
          %v1310 = vsub.s32 0, %v1309
          %v1311 = vrot.slane %v1306, %v1310
          %v1312 = vlaneseq
          %v1313 = vshrl.u32 %v1312, 7
          %v1314 = vsub.s32 1, %v1313
          %v1315 = vrot.slane %v1306, %v1314
          %v1318 = vadd.f32 %v1304, %v1311
          %v1319 = vadd.f32 %v1305, %v1315
          %1320 = vst [vmem:[%s319] sm:$0xff] %v1318
          %1321 = vst [vmem:[%s319 + $0x8] sm:$0xff] %v1319
        $region64: #{tpu_custom_call.1} parent=39 // pred_fallthru
          _
        %s1322 = sand.u32 %s169, 1
        %s1323 = scalar_lea.sflag [#allocation5], %s1322
        %s1324 = sand.u32 %s169, 1
        %s1325 = smul.addr %s1324, 16
        %s1326 = scalar_lea.vmem [#allocation11], %s1325
        // Predicated region
        $region65: #{tpu_custom_call.1} parent=39 // pred_check
          %p1327 = pneg %p179
        $region66: #{tpu_custom_call.1} parent=39 // pred_check_branch
          %1329 = sbr.rel (%p1327) target = $region68
        $region67: #{tpu_custom_call.1} parent=39 // pred_region
          %s1331 = ssub.s32 256, 256
          %1332 = vsyncadd %s1323, %s1331
          %s1333 = smul.addr %s28, 2
          %s1334 = smul.addr %s1333, 128
          %s1335 = scalar_lea.hbm %s5, %s1334
          %s1337 = sshll.u32 %s1326, 4
          %s1338 = int_to_ptr.vmem [resolvable:$true] %s1337
          %1340 = dma.vmem_to_hbm [thread:$0]  %s1338, 256, %s1335, %s1323
        $region68: #{tpu_custom_call.1} parent=39 // pred_fallthru
          _
      $region40: #{tpu_custom_call.1} parent=5 // pred_fallthru
        _
      %p1341 = scmp.le.s32.totalorder 2, %s19
      // Predicated region
      $region69: #{tpu_custom_call.1} parent=5 // pred_check
        %p1342 = pneg %p1341
      $region70: #{tpu_custom_call.1} parent=5 // pred_check_branch
        %1344 = sbr.rel (%p1342) target = $region72
      $region71: #{tpu_custom_call.1} parent=5 // pred_region
        %s1345 = ssub.s32 %s19, 2
        // Predicated region
        $region73: #{tpu_custom_call.1} parent=71 // pred_check
          %p1346 = pneg %p185
        $region74: #{tpu_custom_call.1} parent=71 // pred_check_branch
          %1348 = sbr.rel (%p1346) target = $region76
        $region75: #{tpu_custom_call.1} parent=71 // pred_region
          %s1349 = sand.u32 %s170, 1
          %s1350 = scalar_lea.sflag [#allocation5], %s1349
          %s1351 = sand.u32 %s170, 1
          %s1352 = smul.addr %s1351, 16
          %s1353 = scalar_lea.vmem [#allocation11], %s1352
          %1354 = dma.done %s1350, 256
        $region76: #{tpu_custom_call.1} parent=71 // pred_fallthru
          _
      $region72: #{tpu_custom_call.1} parent=5 // pred_fallthru
        _
    $region6: #{tpu_custom_call.1} parent=1 // loop_footer
      %s23 = sadd.s32 1, %s19
    $region7: #{tpu_custom_call.1} parent=1 // loop_footer_branch
      %18 = sbr.rel target = $region3
    $region8: #{tpu_custom_call.1} parent=1 // loop_exit
      _
    %1355 = vsyncpa [#allocation4], 1
    %s1356 = scalar_lea.sflag [#allocation4], 1
    %1357 = vsyncpa %s1356, 1
    %1358 = vsyncpa [#allocation7], 1
    %1359 = vsyncpa [#allocation10], 1
    %1360 = vsyncpa [#allocation5], 1
    %s1361 = scalar_lea.sflag [#allocation5], 1
    %1362 = vsyncpa %s1361, 1

</llo_original>
